<compile_context>
chip_gen: v5e
topology: v5e:2x2
jax: 0.10.0
libtpu: 0.0.40
codegen_flags: <defaults>
</compile_context>

<pallas_src>
import jax
import jax.numpy as jnp
from jax.experimental import pallas as pl
from jax.experimental.pallas import tpu as pltpu


def _round_up(x, m):
    return ((x + m - 1) // m) * m


def _qmlp_kernel(s_ref, a_ref, *refs):
    """refs = (w1s, w1a, b1, [wh, bh]*(depth-1), wo_row, bo, out)."""
    out_ref = refs[-1]
    p = refs[:-1]
    w1s_ref, w1a_ref, b1_ref = p[0], p[1], p[2]
    wo_ref, bo_ref = p[-2], p[-1]          # wo_row: (1, width) f32, bo: (1, 1) f32
    hidden = p[3:-2]                       # pairs of (w, b)

    # Inputs arrive as f32 (no wrapper-side astype copy through HBM); cast to
    # the weight dtype (bf16) right before the MXU dots.
    s = s_ref[...].astype(w1s_ref.dtype)
    a = a_ref[...].astype(w1a_ref.dtype)

    # Input layer: s@W1s + a@W1a (bf16 MXU, f32 accumulate) + bias, ReLU in f32.
    h = jnp.dot(s, w1s_ref[...], preferred_element_type=jnp.float32)
    h = h + jnp.dot(a, w1a_ref[...], preferred_element_type=jnp.float32)
    h = jnp.maximum(h + b1_ref[...], 0.0)

    # Hidden layers (statically unrolled; depth is a compile-time constant).
    for i in range(0, len(hidden), 2):
        w_ref, b_ref = hidden[i], hidden[i + 1]
        h = jnp.dot(h.astype(w_ref.dtype), w_ref[...],
                    preferred_element_type=jnp.float32)
        h = jnp.maximum(h + b_ref[...], 0.0)

    # Output layer (width -> 1) on VPU/XLU: elementwise mul + lane reduce,
    # written lane-dense as a (1, tile_m) row (unmasked vst).
    q = jnp.sum(h * wo_ref[...], axis=-1)          # (tile_m,)
    out_ref[...] = q[None, :] + bo_ref[...]        # (1, tile_m)


def qmlp_forward(s, a, params, *, tile_m=None, compute_dtype=jnp.bfloat16):
    """params: list of (W, b) with W of shape [in, out], b of shape [1, out].

    Matches PyTorch QMLP.forward(s, a) (Flatten + concat + Linear/ReLU stack).
    """
    s2 = s.reshape(s.shape[0], -1)
    a2 = a.reshape(a.shape[0], -1)
    batch, s_dim = s2.shape
    a_dim = a2.shape[1]

    # Adaptive batch tile (see header comment).
    if tile_m is None:
        cap = 2048                                   # v5e scoped-VMEM safe
        tile_m = min(cap, max(128, _round_up(pl.cdiv(batch, 2), 128)))
    assert tile_m % 128 == 0, "tile_m must be a multiple of 128"

    num_tiles = pl.cdiv(batch, tile_m)
    batch_p = num_tiles * tile_m
    # NOTE: no jnp.pad / astype on s2, a2 — the last (possibly partial) input
    # tile is handled by Pallas edge-block handling; padded tail rows of the
    # (1, batch_p) output are sliced off below.

    # Split the first-layer weight so the concat never materializes in HBM.
    w1, b1 = params[0]
    flat = [
        w1[:s_dim].astype(compute_dtype),           # W1_state  (s_dim, width)
        w1[s_dim:].astype(compute_dtype),           # W1_action (a_dim, width)
        b1.astype(jnp.float32),                     # (1, width)
    ]
    for (w, b) in params[1:-1]:
        flat.append(w.astype(compute_dtype))        # (width, width)
        flat.append(b.astype(jnp.float32))          # (1, width)
    wo, bo = params[-1]
    flat.append(wo.astype(jnp.float32).reshape(1, -1))   # (1, width) row
    flat.append(bo.astype(jnp.float32).reshape(1, 1))    # (1, 1) scalar

    in_specs = [
        pl.BlockSpec((tile_m, s_dim), lambda i: (i, 0)),
        pl.BlockSpec((tile_m, a_dim), lambda i: (i, 0)),
    ]
    # Weights/biases: whole-array blocks with constant index maps -> resident
    # in VMEM, no re-DMA across batch tiles.
    for prm in flat:
        in_specs.append(pl.BlockSpec(prm.shape, lambda i: (0, 0)))

    width = flat[0].shape[1]
    depth = len(params) - 1
    flops = 2 * batch * ((s_dim + a_dim) * width
                         + (depth - 1) * width * width + width)
    bytes_accessed = (s2.size * s2.dtype.itemsize
                      + a2.size * a2.dtype.itemsize
                      + sum(int(p.size) * p.dtype.itemsize for p in flat)
                      + batch_p * 4)

    out = pl.pallas_call(
        _qmlp_kernel,
        out_shape=jax.ShapeDtypeStruct((1, batch_p), jnp.float32),
        grid_spec=pltpu.PrefetchScalarGridSpec(
            num_scalar_prefetch=0,
            grid=(num_tiles,),
            in_specs=in_specs,
            out_specs=pl.BlockSpec((1, tile_m), lambda i: (0, i)),
        ),
        compiler_params=pltpu.CompilerParams(
            dimension_semantics=("parallel",),
        ),
        cost_estimate=pl.CostEstimate(
            flops=int(flops), transcendentals=0,
            bytes_accessed=int(bytes_accessed)),
    )(s2, a2, *flat)

    # Undo the lane-dense layout: (1, batch_p) -> (batch, 1).
    return out.reshape(batch_p, 1)[:batch]


def init_params(key, input_dim, width, depth, output_dim=1):
    """Deterministic init mimicking nn.Linear's uniform(-1/sqrt(fan_in), ...)."""
    dims = [input_dim] + [width] * depth + [output_dim]
    params = []
    for i in range(len(dims) - 1):
        fan_in, fan_out = dims[i], dims[i + 1]
        key, kw, kb = jax.random.split(key, 3)
        bound = 1.0 / jnp.sqrt(float(fan_in))
        w = jax.random.uniform(kw, (fan_in, fan_out), jnp.float32, -bound, bound)
        b = jax.random.uniform(kb, (1, fan_out), jnp.float32, -bound, bound)
        params.append((w, b))
    return params


def reference_forward(s, a, params, compute_dtype=jnp.bfloat16):
    """Pure-JAX reference mirroring the kernel's dtypes (bf16 dots, f32 acc)."""
    s2 = s.reshape(s.shape[0], -1).astype(compute_dtype)
    a2 = a.reshape(a.shape[0], -1).astype(compute_dtype)
    s_dim = s2.shape[1]

    w1, b1 = params[0]
    h = jnp.dot(s2, w1[:s_dim].astype(compute_dtype),
                preferred_element_type=jnp.float32)
    h = h + jnp.dot(a2, w1[s_dim:].astype(compute_dtype),
                    preferred_element_type=jnp.float32)
    h = jnp.maximum(h + b1, 0.0)

    for (w, b) in params[1:-1]:
        h = jnp.dot(h.astype(compute_dtype), w.astype(compute_dtype),
                    preferred_element_type=jnp.float32)
        h = jnp.maximum(h + b, 0.0)

    wo, bo = params[-1]
    return jnp.sum(h * wo.reshape(1, -1), axis=-1, keepdims=True) + bo


if __name__ == "__main__":
    # Small shapes consistent with QMLP(state_dim, action_dim, width, depth).
    # s is rank-3 to exercise the Flatten; flattened state_dim = 3*4 = 12.
    state_shape, action_dim = (3, 4), 4
    state_dim = state_shape[0] * state_shape[1]
    width, depth = 32, 2
    batch = 200          # not a multiple of 128 -> exercises the partial edge tile

    key = jax.random.PRNGKey(0)
    key, ks, ka, kp = jax.random.split(key, 4)
    s = jax.random.normal(ks, (batch,) + state_shape, jnp.float32)
    a = jax.random.normal(ka, (batch, action_dim), jnp.float32)

    params = init_params(kp, state_dim + action_dim, width, depth, output_dim=1)

    q = qmlp_forward(s, a, params)           # adaptive tile_m (=128 here, 2 tiles)
    q = jax.block_until_ready(q)

    q_ref = reference_forward(s, a, params)
    assert q.shape == (batch, 1)
    assert jnp.allclose(q, q_ref, atol=1e-3, rtol=1e-3), "mismatch vs reference"

    print("KERNEL_OK")
</pallas_src>

<mosaic_0001>
module attributes {stable_mosaic.version = 11 : i64} {
  func.func @_qmlp_kernel(%arg0: i32, %arg1: memref<128x12xf32, #tpu.memory_space<vmem>>, %arg2: memref<128x4xf32, #tpu.memory_space<vmem>>, %arg3: memref<12x32xbf16, #tpu.memory_space<vmem>>, %arg4: memref<4x32xbf16, #tpu.memory_space<vmem>>, %arg5: memref<1x32xf32, #tpu.memory_space<vmem>>, %arg6: memref<32x32xbf16, #tpu.memory_space<vmem>>, %arg7: memref<1x32xf32, #tpu.memory_space<vmem>>, %arg8: memref<1x32xf32, #tpu.memory_space<vmem>>, %arg9: memref<1x1xf32, #tpu.memory_space<vmem>>, %arg10: memref<1x128xf32, #tpu.memory_space<vmem>>) attributes {dimension_semantics = [#tpu.dimension_semantics<parallel>], iteration_bounds = array<i64: 2>, scalar_prefetch = 0 : i64, scratch_operands = 0 : i64, tpu.core_type = #tpu.core_type<tc>, window_params = [{transform_indices = @transform_0, window_bounds = array<i64: 128, 12>}, {transform_indices = @transform_1, window_bounds = array<i64: 128, 4>}, {pipeline_mode = #tpu.pipeline_mode<synchronous>, transform_indices = @transform_2, window_bounds = array<i64: 12, 32>}, {pipeline_mode = #tpu.pipeline_mode<synchronous>, transform_indices = @transform_3, window_bounds = array<i64: 4, 32>}, {pipeline_mode = #tpu.pipeline_mode<synchronous>, transform_indices = @transform_4, window_bounds = array<i64: 1, 32>}, {pipeline_mode = #tpu.pipeline_mode<synchronous>, transform_indices = @transform_5, window_bounds = array<i64: 32, 32>}, {pipeline_mode = #tpu.pipeline_mode<synchronous>, transform_indices = @transform_6, window_bounds = array<i64: 1, 32>}, {pipeline_mode = #tpu.pipeline_mode<synchronous>, transform_indices = @transform_7, window_bounds = array<i64: 1, 32>}, {pipeline_mode = #tpu.pipeline_mode<synchronous>, transform_indices = @transform_8, window_bounds = array<i64: 1, 1>}, {transform_indices = @transform_9, window_bounds = array<i64: 1, 128>}]} {
    %c0 = arith.constant 0 : index
    %c0_0 = arith.constant 0 : index
    %0 = vector.load %arg1[%c0, %c0_0] : memref<128x12xf32, #tpu.memory_space<vmem>>, vector<128x12xf32>
    %1 = arith.truncf %0 : vector<128x12xf32> to vector<128x12xbf16>
    %c0_1 = arith.constant 0 : index
    %c0_2 = arith.constant 0 : index
    %2 = vector.load %arg2[%c0_1, %c0_2] : memref<128x4xf32, #tpu.memory_space<vmem>>, vector<128x4xf32>
    %3 = arith.truncf %2 : vector<128x4xf32> to vector<128x4xbf16>
    %c0_3 = arith.constant 0 : index
    %c0_4 = arith.constant 0 : index
    %4 = vector.load %arg3[%c0_3, %c0_4] : memref<12x32xbf16, #tpu.memory_space<vmem>>, vector<12x32xbf16>
    %cst = arith.constant dense<0.000000e+00> : vector<128x32xf32>
    %5 = tpu.matmul %1, %4, %cst {dimension_numbers = #tpu.dot_dimension_numbers<[1], [0], [0], [1], [0, 0, 1, 1], [], []>} : vector<128x12xbf16>, vector<12x32xbf16>, vector<128x32xf32> -> vector<128x32xf32>
    %c0_5 = arith.constant 0 : index
    %c0_6 = arith.constant 0 : index
    %6 = vector.load %arg4[%c0_5, %c0_6] : memref<4x32xbf16, #tpu.memory_space<vmem>>, vector<4x32xbf16>
    %cst_7 = arith.constant dense<0.000000e+00> : vector<128x32xf32>
    %7 = tpu.matmul %3, %6, %cst_7 {dimension_numbers = #tpu.dot_dimension_numbers<[1], [0], [0], [1], [0, 0, 1, 1], [], []>} : vector<128x4xbf16>, vector<4x32xbf16>, vector<128x32xf32> -> vector<128x32xf32>
    %8 = arith.addf %5, %7 : vector<128x32xf32>
    %c0_8 = arith.constant 0 : index
    %c0_9 = arith.constant 0 : index
    %9 = vector.load %arg5[%c0_8, %c0_9] : memref<1x32xf32, #tpu.memory_space<vmem>>, vector<1x32xf32>
    %10 = vector.broadcast %9 : vector<1x32xf32> to vector<128x32xf32>
    %11 = arith.addf %8, %10 : vector<128x32xf32>
    %cst_10 = arith.constant 0.000000e+00 : f32
    %12 = vector.broadcast %cst_10 : f32 to vector<128x32xf32>
    %13 = arith.maximumf %11, %12 : vector<128x32xf32>
    %14 = arith.truncf %13 : vector<128x32xf32> to vector<128x32xbf16>
    %c0_11 = arith.constant 0 : index
    %c0_12 = arith.constant 0 : index
    %15 = vector.load %arg6[%c0_11, %c0_12] : memref<32x32xbf16, #tpu.memory_space<vmem>>, vector<32x32xbf16>
    %cst_13 = arith.constant dense<0.000000e+00> : vector<128x32xf32>
    %16 = tpu.matmul %14, %15, %cst_13 {dimension_numbers = #tpu.dot_dimension_numbers<[1], [0], [0], [1], [0, 0, 1, 1], [], []>} : vector<128x32xbf16>, vector<32x32xbf16>, vector<128x32xf32> -> vector<128x32xf32>
    %c0_14 = arith.constant 0 : index
    %c0_15 = arith.constant 0 : index
    %17 = vector.load %arg7[%c0_14, %c0_15] : memref<1x32xf32, #tpu.memory_space<vmem>>, vector<1x32xf32>
    %18 = vector.broadcast %17 : vector<1x32xf32> to vector<128x32xf32>
    %19 = arith.addf %16, %18 : vector<128x32xf32>
    %cst_16 = arith.constant 0.000000e+00 : f32
    %20 = vector.broadcast %cst_16 : f32 to vector<128x32xf32>
    %21 = arith.maximumf %19, %20 : vector<128x32xf32>
    %c0_17 = arith.constant 0 : index
    %c0_18 = arith.constant 0 : index
    %22 = vector.load %arg8[%c0_17, %c0_18] : memref<1x32xf32, #tpu.memory_space<vmem>>, vector<1x32xf32>
    %23 = vector.broadcast %22 : vector<1x32xf32> to vector<128x32xf32>
    %24 = arith.mulf %21, %23 : vector<128x32xf32>
    %cst_19 = arith.constant dense<0.000000e+00> : vector<128xf32>
    %25 = vector.multi_reduction <add>, %24, %cst_19 [1] : vector<128x32xf32> to vector<128xf32>
    %26 = vector.shape_cast %25 : vector<128xf32> to vector<1x128xf32>
    %c0_20 = arith.constant 0 : index
    %c0_21 = arith.constant 0 : index
    %27 = vector.load %arg9[%c0_20, %c0_21] : memref<1x1xf32, #tpu.memory_space<vmem>>, vector<1x1xf32>
    %28 = vector.broadcast %27 : vector<1x1xf32> to vector<1x128xf32>
    %29 = arith.addf %26, %28 : vector<1x128xf32>
    %c0_22 = arith.constant 0 : index
    %c0_23 = arith.constant 0 : index
    %30 = vector.load %arg10[%c0_22, %c0_23] : memref<1x128xf32, #tpu.memory_space<vmem>>, vector<1x128xf32>
    tpu.vector_store %arg10[%c0_22, %c0_23], %29 {strides = array<i32>} : memref<1x128xf32, #tpu.memory_space<vmem>>, vector<1x128xf32>,
    return
  }
  func.func @transform_0(%arg0: i32) -> (i32, i32) {
    %c0_i32 = arith.constant 0 : i32
    %c0_i32_0 = arith.constant 0 : i32
    return %arg0, %c0_i32 : i32, i32
  }
  func.func @transform_1(%arg0: i32) -> (i32, i32) {
    %c0_i32 = arith.constant 0 : i32
    %c0_i32_0 = arith.constant 0 : i32
    return %arg0, %c0_i32 : i32, i32
  }
  func.func @transform_2(%arg0: i32) -> (i32, i32) {
    %c0_i32 = arith.constant 0 : i32
    %c0_i32_0 = arith.constant 0 : i32
    %c0_i32_1 = arith.constant 0 : i32
    return %c0_i32, %c0_i32_0 : i32, i32
  }
  func.func @transform_3(%arg0: i32) -> (i32, i32) {
    %c0_i32 = arith.constant 0 : i32
    %c0_i32_0 = arith.constant 0 : i32
    %c0_i32_1 = arith.constant 0 : i32
    return %c0_i32, %c0_i32_0 : i32, i32
  }
  func.func @transform_4(%arg0: i32) -> (i32, i32) {
    %c0_i32 = arith.constant 0 : i32
    %c0_i32_0 = arith.constant 0 : i32
    %c0_i32_1 = arith.constant 0 : i32
    return %c0_i32, %c0_i32_0 : i32, i32
  }
  func.func @transform_5(%arg0: i32) -> (i32, i32) {
    %c0_i32 = arith.constant 0 : i32
    %c0_i32_0 = arith.constant 0 : i32
    %c0_i32_1 = arith.constant 0 : i32
    return %c0_i32, %c0_i32_0 : i32, i32
  }
  func.func @transform_6(%arg0: i32) -> (i32, i32) {
    %c0_i32 = arith.constant 0 : i32
    %c0_i32_0 = arith.constant 0 : i32
    %c0_i32_1 = arith.constant 0 : i32
    return %c0_i32, %c0_i32_0 : i32, i32
  }
  func.func @transform_7(%arg0: i32) -> (i32, i32) {
    %c0_i32 = arith.constant 0 : i32
    %c0_i32_0 = arith.constant 0 : i32
    %c0_i32_1 = arith.constant 0 : i32
    return %c0_i32, %c0_i32_0 : i32, i32
  }
  func.func @transform_8(%arg0: i32) -> (i32, i32) {
    %c0_i32 = arith.constant 0 : i32
    %c0_i32_0 = arith.constant 0 : i32
    %c0_i32_1 = arith.constant 0 : i32
    return %c0_i32, %c0_i32_0 : i32, i32
  }
  func.func @transform_9(%arg0: i32) -> (i32, i32) {
    %c0_i32 = arith.constant 0 : i32
    %c0_i32_0 = arith.constant 0 : i32
    return %c0_i32, %arg0 : i32, i32
  }
}

</mosaic_0001>

<llo_original>
// kernel: tpu_custom_call.1
$region0: #{tpu_custom_call.1}
  #allocation0 [shape = 'u32[]', space=smem, size = 0x4, offset = 0x4, fixed_abs, tag = 'smem constant byte address 0x4 - core index']
  #allocation1 [shape = 'u32[72,128]{1,0:T(1,128)}', space=vmem, size = 0x9000, scoped, tag = 'internal scratch']
  #allocation2 [shape = 'f32[1,1]{1,0:T(1,128)S(1)}', space=vmem, size = 0x200, scoped, tag = 'scoped memory for tpu_custom_call.1']
  %s0 = inlined_call_operand.vmem [shape: f32[200,12], index: 0, kind: input, shape index: {}]
  %s1 = inlined_call_operand.vmem [shape: f32[200,4], index: 1, kind: input, shape index: {}]
  %s2 = inlined_call_operand.vmem [shape: bf16[12,32], index: 2, kind: input, shape index: {}]
  %s3 = inlined_call_operand.vmem [shape: bf16[4,32], index: 3, kind: input, shape index: {}]
  %s4 = inlined_call_operand.vmem [shape: f32[1,32], index: 4, kind: input, shape index: {}]
  %s5 = inlined_call_operand.vmem [shape: bf16[32,32], index: 5, kind: input, shape index: {}]
  %s6 = inlined_call_operand.vmem [shape: f32[1,32], index: 6, kind: input, shape index: {}]
  %s7 = inlined_call_operand.vmem [shape: f32[1,32], index: 7, kind: input, shape index: {}]
  %s8 = inlined_call_operand.<no memory space> [shape: f32[1,1], index: 8, kind: input, shape index: {}]
  %s9 = inlined_call_operand.hbm [shape: f32[1,256], index: 9, kind: output, shape index: {}]
  %s10 = sld [smem:[#allocation0]]
  $region69: #{tpu_custom_call.1} parent=0
    _
  %s12 = ssub.s32 1, %s10
  %s13 = scalar_select 0, %s12, %s10
  %v14 = vstv %s8
  %15 = vst [vmem:[#allocation2] sm:$0x1] %v14
  $region1: #{tpu_custom_call.1} parent=0
    #allocation3 [shape = 'u8[1024]{0}', space=vmem, size = 0x400, scoped, tag = 'output window, operand 0']
    #allocation4 [shape = 's32[2]{0}', space=sflag, size = 0x8, scoped, tag = 'scoped memory for tpu_custom_call.1']
    %16 = vsyncpa [#allocation4], 0
    %s17 = scalar_lea.sflag [#allocation4], 1
    %18 = vsyncpa %s17, 0
    loop: start=0, step=1, limit=4
    $region2: #{tpu_custom_call.1} parent=1 // loop_pre_header
      _
    $region3: #{tpu_custom_call.1} parent=1 // loop_header
      %s20 = sphi 0, %s24
      %p21 = scmp.ge.s32.totalorder %s20, 4
      %s30 = sphi 0, %s32
      %s33 = sphi 0, %s30
      %s34 = sphi 0, %s33
      %s50 = sphi 0, %s34
      %s56 = sphi 0, %s58
      %s59 = sphi 0, %s56
      %s60 = sphi 0, %s59
      %s76 = sphi 0, %s60
      %s80 = sphi 0, %s80
      %s82 = sphi 0, %s80
      %s83 = sphi 0, %s82
      %s97 = sphi 0, %s83
      %s101 = sphi 0, %s101
      %s103 = sphi 0, %s101
      %s104 = sphi 0, %s103
      %s118 = sphi 0, %s104
      %s122 = sphi 0, %s122
      %s124 = sphi 0, %s122
      %s125 = sphi 0, %s124
      %s139 = sphi 0, %s125
      %s143 = sphi 0, %s143
      %s145 = sphi 0, %s143
      %s146 = sphi 0, %s145
      %s160 = sphi 0, %s146
      %s164 = sphi 0, %s164
      %s166 = sphi 0, %s164
      %s167 = sphi 0, %s166
      %s181 = sphi 0, %s167
      %s185 = sphi 0, %s185
      %s187 = sphi 0, %s185
      %s188 = sphi 0, %s187
      %s202 = sphi 0, %s188
      %s206 = sphi 0, %s206
      %s208 = sphi 0, %s206
      %s209 = sphi 0, %s208
      %s223 = sphi 0, %s209
      %s229 = sphi 0, %s231
      %s232 = sphi 0, %s229
      %s233 = sphi 0, %s232
      %s249 = sphi 0, %s233
    $region4: #{tpu_custom_call.1} parent=1 // loop_header_branch
      %23 = sbr.rel (%p21) target = $region8
    $region5: #{tpu_custom_call.1} parent=1 // loop_body
      %s25 = ssub.s32 %s20, 1
      %s26 = ssub.s32 %s20, 2
      %s27 = sadd.s32 %s20, 1
      %s28 = ssub.s32 %s20, %s27
      %p29 = scmp.eq.s32.totalorder %s28, 0
      %s31 = sadd.s32 %s30, 1
      %s32 = scalar_select %p29, %s30, %s31
      %p35 = pneg %p29
      %p36 = scmp.eq.s32.totalorder %s20, 1
      %p37 = por %p35, %p36
      %p38 = scmp.ne.s32.totalorder %s30, %s33
      %p39 = scmp.eq.s32.totalorder %s20, 0
      %p40 = por %p38, %p39
      %p41 = scmp.ne.s32.totalorder %s30, %s33
      %p42 = scmp.eq.s32.totalorder %s25, 1
      %p43 = por %p41, %p42
      %p44 = scmp.ne.s32.totalorder %s33, %s34
      %p45 = scmp.eq.s32.totalorder %s25, 0
      %p46 = por %p44, %p45
      %p47 = scmp.ne.s32.totalorder %s33, %s34
      %p48 = scmp.eq.s32.totalorder %s26, 1
      %p49 = por %p47, %p48
      %p51 = scmp.ne.s32.totalorder %s34, %s50
      %p52 = scmp.eq.s32.totalorder %s26, 0
      %p53 = por %p51, %p52
      %s54 = ssub.s32 %s20, %s27
      %p55 = scmp.eq.s32.totalorder %s54, 0
      %s57 = sadd.s32 %s56, 1
      %s58 = scalar_select %p55, %s56, %s57
      %p61 = pneg %p55
      %p62 = scmp.eq.s32.totalorder %s20, 1
      %p63 = por %p61, %p62
      %p64 = scmp.ne.s32.totalorder %s56, %s59
      %p65 = scmp.eq.s32.totalorder %s20, 0
      %p66 = por %p64, %p65
      %p67 = scmp.ne.s32.totalorder %s56, %s59
      %p68 = scmp.eq.s32.totalorder %s25, 1
      %p69 = por %p67, %p68
      %p70 = scmp.ne.s32.totalorder %s59, %s60
      %p71 = scmp.eq.s32.totalorder %s25, 0
      %p72 = por %p70, %p71
      %p73 = scmp.ne.s32.totalorder %s59, %s60
      %p74 = scmp.eq.s32.totalorder %s26, 1
      %p75 = por %p73, %p74
      %p77 = scmp.ne.s32.totalorder %s60, %s76
      %p78 = scmp.eq.s32.totalorder %s26, 0
      %p79 = por %p77, %p78
      %s81 = sadd.s32 %s80, 1
      %p84 = scmp.eq.s32.totalorder %s20, 1
      %p85 = scmp.ne.s32.totalorder %s80, %s82
      %p86 = scmp.eq.s32.totalorder %s20, 0
      %p87 = por %p85, %p86
      %p88 = scmp.ne.s32.totalorder %s80, %s82
      %p89 = scmp.eq.s32.totalorder %s25, 1
      %p90 = por %p88, %p89
      %p91 = scmp.ne.s32.totalorder %s82, %s83
      %p92 = scmp.eq.s32.totalorder %s25, 0
      %p93 = por %p91, %p92
      %p94 = scmp.ne.s32.totalorder %s82, %s83
      %p95 = scmp.eq.s32.totalorder %s26, 1
      %p96 = por %p94, %p95
      %p98 = scmp.ne.s32.totalorder %s83, %s97
      %p99 = scmp.eq.s32.totalorder %s26, 0
      %p100 = por %p98, %p99
      %s102 = sadd.s32 %s101, 1
      %p105 = scmp.eq.s32.totalorder %s20, 1
      %p106 = scmp.ne.s32.totalorder %s101, %s103
      %p107 = scmp.eq.s32.totalorder %s20, 0
      %p108 = por %p106, %p107
      %p109 = scmp.ne.s32.totalorder %s101, %s103
      %p110 = scmp.eq.s32.totalorder %s25, 1
      %p111 = por %p109, %p110
      %p112 = scmp.ne.s32.totalorder %s103, %s104
      %p113 = scmp.eq.s32.totalorder %s25, 0
      %p114 = por %p112, %p113
      %p115 = scmp.ne.s32.totalorder %s103, %s104
      %p116 = scmp.eq.s32.totalorder %s26, 1
      %p117 = por %p115, %p116
      %p119 = scmp.ne.s32.totalorder %s104, %s118
      %p120 = scmp.eq.s32.totalorder %s26, 0
      %p121 = por %p119, %p120
      %s123 = sadd.s32 %s122, 1
      %p126 = scmp.eq.s32.totalorder %s20, 1
      %p127 = scmp.ne.s32.totalorder %s122, %s124
      %p128 = scmp.eq.s32.totalorder %s20, 0
      %p129 = por %p127, %p128
      %p130 = scmp.ne.s32.totalorder %s122, %s124
      %p131 = scmp.eq.s32.totalorder %s25, 1
      %p132 = por %p130, %p131
      %p133 = scmp.ne.s32.totalorder %s124, %s125
      %p134 = scmp.eq.s32.totalorder %s25, 0
      %p135 = por %p133, %p134
      %p136 = scmp.ne.s32.totalorder %s124, %s125
      %p137 = scmp.eq.s32.totalorder %s26, 1
      %p138 = por %p136, %p137
      %p140 = scmp.ne.s32.totalorder %s125, %s139
      %p141 = scmp.eq.s32.totalorder %s26, 0
      %p142 = por %p140, %p141
      %s144 = sadd.s32 %s143, 1
      %p147 = scmp.eq.s32.totalorder %s20, 1
      %p148 = scmp.ne.s32.totalorder %s143, %s145
      %p149 = scmp.eq.s32.totalorder %s20, 0
      %p150 = por %p148, %p149
      %p151 = scmp.ne.s32.totalorder %s143, %s145
      %p152 = scmp.eq.s32.totalorder %s25, 1
      %p153 = por %p151, %p152
      %p154 = scmp.ne.s32.totalorder %s145, %s146
      %p155 = scmp.eq.s32.totalorder %s25, 0
      %p156 = por %p154, %p155
      %p157 = scmp.ne.s32.totalorder %s145, %s146
      %p158 = scmp.eq.s32.totalorder %s26, 1
      %p159 = por %p157, %p158
      %p161 = scmp.ne.s32.totalorder %s146, %s160
      %p162 = scmp.eq.s32.totalorder %s26, 0
      %p163 = por %p161, %p162
      %s165 = sadd.s32 %s164, 1
      %p168 = scmp.eq.s32.totalorder %s20, 1
      %p169 = scmp.ne.s32.totalorder %s164, %s166
      %p170 = scmp.eq.s32.totalorder %s20, 0
      %p171 = por %p169, %p170
      %p172 = scmp.ne.s32.totalorder %s164, %s166
      %p173 = scmp.eq.s32.totalorder %s25, 1
      %p174 = por %p172, %p173
      %p175 = scmp.ne.s32.totalorder %s166, %s167
      %p176 = scmp.eq.s32.totalorder %s25, 0
      %p177 = por %p175, %p176
      %p178 = scmp.ne.s32.totalorder %s166, %s167
      %p179 = scmp.eq.s32.totalorder %s26, 1
      %p180 = por %p178, %p179
      %p182 = scmp.ne.s32.totalorder %s167, %s181
      %p183 = scmp.eq.s32.totalorder %s26, 0
      %p184 = por %p182, %p183
      %s186 = sadd.s32 %s185, 1
      %p189 = scmp.eq.s32.totalorder %s20, 1
      %p190 = scmp.ne.s32.totalorder %s185, %s187
      %p191 = scmp.eq.s32.totalorder %s20, 0
      %p192 = por %p190, %p191
      %p193 = scmp.ne.s32.totalorder %s185, %s187
      %p194 = scmp.eq.s32.totalorder %s25, 1
      %p195 = por %p193, %p194
      %p196 = scmp.ne.s32.totalorder %s187, %s188
      %p197 = scmp.eq.s32.totalorder %s25, 0
      %p198 = por %p196, %p197
      %p199 = scmp.ne.s32.totalorder %s187, %s188
      %p200 = scmp.eq.s32.totalorder %s26, 1
      %p201 = por %p199, %p200
      %p203 = scmp.ne.s32.totalorder %s188, %s202
      %p204 = scmp.eq.s32.totalorder %s26, 0
      %p205 = por %p203, %p204
      %s207 = sadd.s32 %s206, 1
      %p210 = scmp.eq.s32.totalorder %s20, 1
      %p211 = scmp.ne.s32.totalorder %s206, %s208
      %p212 = scmp.eq.s32.totalorder %s20, 0
      %p213 = por %p211, %p212
      %p214 = scmp.ne.s32.totalorder %s206, %s208
      %p215 = scmp.eq.s32.totalorder %s25, 1
      %p216 = por %p214, %p215
      %p217 = scmp.ne.s32.totalorder %s208, %s209
      %p218 = scmp.eq.s32.totalorder %s25, 0
      %p219 = por %p217, %p218
      %p220 = scmp.ne.s32.totalorder %s208, %s209
      %p221 = scmp.eq.s32.totalorder %s26, 1
      %p222 = por %p220, %p221
      %p224 = scmp.ne.s32.totalorder %s209, %s223
      %p225 = scmp.eq.s32.totalorder %s26, 0
      %p226 = por %p224, %p225
      %s227 = ssub.s32 %s20, %s27
      %p228 = scmp.eq.s32.totalorder %s227, 0
      %s230 = sadd.s32 %s229, 1
      %s231 = scalar_select %p228, %s229, %s230
      %p234 = pneg %p228
      %p235 = scmp.eq.s32.totalorder %s20, 1
      %p236 = por %p234, %p235
      %p237 = scmp.ne.s32.totalorder %s229, %s232
      %p238 = scmp.eq.s32.totalorder %s20, 0
      %p239 = por %p237, %p238
      %p240 = scmp.ne.s32.totalorder %s229, %s232
      %p241 = scmp.eq.s32.totalorder %s25, 1
      %p242 = por %p240, %p241
      %p243 = scmp.ne.s32.totalorder %s232, %s233
      %p244 = scmp.eq.s32.totalorder %s25, 0
      %p245 = por %p243, %p244
      %p246 = scmp.ne.s32.totalorder %s232, %s233
      %p247 = scmp.eq.s32.totalorder %s26, 1
      %p248 = por %p246, %p247
      %p250 = scmp.ne.s32.totalorder %s233, %s249
      %p251 = scmp.eq.s32.totalorder %s26, 0
      %p252 = por %p250, %p251
      %p253 = scmp.le.s32.totalorder 1, %s20
      %p254 = scmp.lt.s32.totalorder %s20, 3
      %p255 = pnand %p253, %p254
      %p256 = pneg %p255
      // Predicated region
      $region9: #{tpu_custom_call.1} parent=5 // pred_check
        _
      $region10: #{tpu_custom_call.1} parent=5 // pred_check_branch
        %258 = sbr.rel (%p255) target = $region12
      $region11: #{tpu_custom_call.1} parent=5 // pred_region
        %s259 = ssub.s32 %s20, 1
        // Predicated region
        $region13: #{tpu_custom_call.1} parent=11 // pred_check
          %p260 = pneg %p93
        $region14: #{tpu_custom_call.1} parent=11 // pred_check_branch
          %262 = sbr.rel (%p260) target = $region16
        $region15: #{tpu_custom_call.1} parent=11 // pred_region
          _
        $region16: #{tpu_custom_call.1} parent=11 // pred_fallthru
          _
        // Predicated region
        $region17: #{tpu_custom_call.1} parent=11 // pred_check
          %p263 = pneg %p114
        $region18: #{tpu_custom_call.1} parent=11 // pred_check_branch
          %265 = sbr.rel (%p263) target = $region20
        $region19: #{tpu_custom_call.1} parent=11 // pred_region
          _
        $region20: #{tpu_custom_call.1} parent=11 // pred_fallthru
          _
        // Predicated region
        $region21: #{tpu_custom_call.1} parent=11 // pred_check
          %p266 = pneg %p135
        $region22: #{tpu_custom_call.1} parent=11 // pred_check_branch
          %268 = sbr.rel (%p266) target = $region24
        $region23: #{tpu_custom_call.1} parent=11 // pred_region
          _
        $region24: #{tpu_custom_call.1} parent=11 // pred_fallthru
          _
        // Predicated region
        $region25: #{tpu_custom_call.1} parent=11 // pred_check
          %p269 = pneg %p156
        $region26: #{tpu_custom_call.1} parent=11 // pred_check_branch
          %271 = sbr.rel (%p269) target = $region28
        $region27: #{tpu_custom_call.1} parent=11 // pred_region
          _
        $region28: #{tpu_custom_call.1} parent=11 // pred_fallthru
          _
        // Predicated region
        $region29: #{tpu_custom_call.1} parent=11 // pred_check
          %p272 = pneg %p177
        $region30: #{tpu_custom_call.1} parent=11 // pred_check_branch
          %274 = sbr.rel (%p272) target = $region32
        $region31: #{tpu_custom_call.1} parent=11 // pred_region
          _
        $region32: #{tpu_custom_call.1} parent=11 // pred_fallthru
          _
        // Predicated region
        $region33: #{tpu_custom_call.1} parent=11 // pred_check
          %p275 = pneg %p198
        $region34: #{tpu_custom_call.1} parent=11 // pred_check_branch
          %277 = sbr.rel (%p275) target = $region36
        $region35: #{tpu_custom_call.1} parent=11 // pred_region
          _
        $region36: #{tpu_custom_call.1} parent=11 // pred_fallthru
          _
        // Predicated region
        $region37: #{tpu_custom_call.1} parent=11 // pred_check
          %p278 = pneg %p219
        $region38: #{tpu_custom_call.1} parent=11 // pred_check_branch
          %280 = sbr.rel (%p278) target = $region40
        $region39: #{tpu_custom_call.1} parent=11 // pred_region
          _
        $region40: #{tpu_custom_call.1} parent=11 // pred_fallthru
          _
      $region12: #{tpu_custom_call.1} parent=5 // pred_fallthru
        _
      %p281 = scmp.lt.s32.totalorder %s20, 2
      // Predicated region
      $region41: #{tpu_custom_call.1} parent=5 // pred_check
        %p282 = pneg %p281
      $region42: #{tpu_custom_call.1} parent=5 // pred_check_branch
        %284 = sbr.rel (%p282) target = $region44
      $region43: #{tpu_custom_call.1} parent=5 // pred_region
        // Predicated region
        $region45: #{tpu_custom_call.1} parent=43 // pred_check
          %p285 = pneg %p40
        $region46: #{tpu_custom_call.1} parent=43 // pred_check_branch
          %287 = sbr.rel (%p285) target = $region48
        $region47: #{tpu_custom_call.1} parent=43 // pred_region
          %s288 = smul.u32 16, %s20
          %s289 = ssub.s32 25, %s288
          %p290 = scmp.lt.s32.totalorder %s289, 16
          %s291 = scalar_select %p290, %s289, 16
          %s292 = smul.u32 8, %s291
          %p293 = scmp.lt.s32.totalorder %s288, 24
          %s294 = scalar_select %p293, %s288, 24
          %s295 = smul.addr %s294, 8
          %s296 = scalar_lea.vmem %s0, %s295
          %s297 = smul.u32 16, %s20
          %s298 = ssub.s32 25, %s297
          %p299 = scmp.lt.s32.totalorder %s298, 16
          %s300 = scalar_select %p299, %s298, 16
          %s301 = smul.u32 8, %s300
        $region48: #{tpu_custom_call.1} parent=43 // pred_fallthru
          _
        // Predicated region
        $region49: #{tpu_custom_call.1} parent=43 // pred_check
          %p302 = pneg %p66
        $region50: #{tpu_custom_call.1} parent=43 // pred_check_branch
          %304 = sbr.rel (%p302) target = $region52
        $region51: #{tpu_custom_call.1} parent=43 // pred_region
          %s305 = smul.u32 16, %s20
          %s306 = ssub.s32 25, %s305
          %p307 = scmp.lt.s32.totalorder %s306, 16
          %s308 = scalar_select %p307, %s306, 16
          %s309 = smul.u32 8, %s308
          %p310 = scmp.lt.s32.totalorder %s305, 24
          %s311 = scalar_select %p310, %s305, 24
          %s312 = smul.addr %s311, 8
          %s313 = scalar_lea.vmem %s1, %s312
          %s314 = smul.u32 16, %s20
          %s315 = ssub.s32 25, %s314
          %p316 = scmp.lt.s32.totalorder %s315, 16
          %s317 = scalar_select %p316, %s315, 16
          %s318 = smul.u32 8, %s317
        $region52: #{tpu_custom_call.1} parent=43 // pred_fallthru
          _
      $region44: #{tpu_custom_call.1} parent=5 // pred_fallthru
        _
      %p319 = scmp.le.s32.totalorder 1, %s20
      %p320 = scmp.lt.s32.totalorder %s20, 3
      %p321 = pnand %p319, %p320
      %p322 = pneg %p321
      // Predicated region
      $region53: #{tpu_custom_call.1} parent=5 // pred_check
        _
      $region54: #{tpu_custom_call.1} parent=5 // pred_check_branch
        %324 = sbr.rel (%p321) target = $region56
      $region55: #{tpu_custom_call.1} parent=5 // pred_region
        %s325 = ssub.s32 %s20, 1
        %s326 = smul.u32 16, %s25
        %s327 = ssub.s32 25, %s326
        %p328 = scmp.lt.s32.totalorder %s327, 16
        %s329 = scalar_select %p328, %s327, 16
        %s330 = smul.u32 8, %s329
        %p331 = scmp.lt.s32.totalorder %s326, 24
        %s332 = scalar_select %p331, %s326, 24
        %s333 = smul.addr %s332, 8
        %s334 = scalar_lea.vmem %s0, %s333
        %p335 = pneg %p46
        %p336 = pneg %p43
        %s337 = smul.u32 16, %s25
        %s338 = ssub.s32 25, %s337
        %p339 = scmp.lt.s32.totalorder %s338, 16
        %s340 = scalar_select %p339, %s338, 16
        %s341 = smul.u32 8, %s340
        %p342 = scmp.lt.s32.totalorder %s337, 24
        %s343 = scalar_select %p342, %s337, 24
        %s344 = smul.addr %s343, 8
        %s345 = scalar_lea.vmem %s1, %s344
        %p346 = pneg %p72
        %p347 = pneg %p69
        %p348 = pneg %p93
        %p349 = pneg %p90
        %p350 = pneg %p114
        %p351 = pneg %p111
        %p352 = pneg %p135
        %p353 = pneg %p132
        %p354 = pneg %p156
        %p355 = pneg %p153
        %p356 = pneg %p177
        %p357 = pneg %p174
        %p358 = pneg %p198
        %p359 = pneg %p195
        %p360 = pneg %p219
        %p361 = pneg %p216
        %p362 = pneg %p245
        %p363 = pneg %p242
        %s364 = sand.u32 %s232, 1
        %s365 = scalar_lea.sflag [#allocation4], %s364
        %s366 = sand.u32 %s232, 1
        %s367 = scalar_lea.vmem [#allocation3], %s366
        %s368 = smul.u32 16, %s25
        %s369 = ssub.s32 25, %s368
        %p370 = scmp.lt.s32.totalorder %s369, 16
        %s371 = scalar_select %p370, %s369, 16
        %s372 = smul.u32 8, %s371
        %p373 = scmp.lt.s32.totalorder %s368, 24
        %s374 = scalar_select %p373, %s368, 24
        %s375 = smul.addr %s374, 8
        %s376 = scalar_lea.vmem %s0, %s375
        %s377 = smul.u32 16, %s25
        %s378 = ssub.s32 25, %s377
        %p379 = scmp.lt.s32.totalorder %s378, 16
        %s380 = scalar_select %p379, %s378, 16
        %s381 = smul.u32 8, %s380
        %s382 = smul.u32 16, %s25
        %s383 = ssub.s32 25, %s382
        %p384 = scmp.lt.s32.totalorder %s383, 16
        %s385 = scalar_select %p384, %s383, 16
        %s386 = smul.u32 8, %s385
        %p387 = scmp.lt.s32.totalorder %s382, 24
        %s388 = scalar_select %p387, %s382, 24
        %s389 = smul.addr %s388, 8
        %s390 = scalar_lea.vmem %s1, %s389
        %s391 = smul.u32 16, %s25
        %s392 = ssub.s32 25, %s391
        %p393 = scmp.lt.s32.totalorder %s392, 16
        %s394 = scalar_select %p393, %s392, 16
        %s395 = smul.u32 8, %s394
        %v397 = vld [vmem:[%s376] sm:$0xff]
        %v398 = vld [vmem:[%s376 + $0x8] sm:$0xff]
        %v399 = vld [vmem:[%s376 + $0x10] sm:$0xff]
        %v400 = vld [vmem:[%s376 + $0x18] sm:$0xff]
        %v401 = vld [vmem:[%s376 + $0x20] sm:$0xff]
        %v402 = vld [vmem:[%s376 + $0x28] sm:$0xff]
        %v403 = vld [vmem:[%s376 + $0x30] sm:$0xff]
        %v404 = vld [vmem:[%s376 + $0x38] sm:$0xff]
        %v405 = vld [vmem:[%s376 + $0x40] sm:$0xff]
        %v406 = vld [vmem:[%s376 + $0x48] sm:$0xff]
        %v407 = vld [vmem:[%s376 + $0x50] sm:$0xff]
        %v408 = vld [vmem:[%s376 + $0x58] sm:$0xff]
        %v409 = vld [vmem:[%s376 + $0x60] sm:$0xff]
        %v410 = vld [vmem:[%s376 + $0x68] sm:$0xff]
        %v411 = vld [vmem:[%s376 + $0x70] sm:$0xff]
        %v412 = vld [vmem:[%s376 + $0x78] sm:$0xff]
        %v413 = vpack.c.bf16 %v398, %v397
        %v414 = vpack.c.bf16 %v400, %v399
        %v415 = vpack.c.bf16 %v402, %v401
        %v416 = vpack.c.bf16 %v404, %v403
        %v417 = vpack.c.bf16 %v406, %v405
        %v418 = vpack.c.bf16 %v408, %v407
        %v419 = vpack.c.bf16 %v410, %v409
        %v420 = vpack.c.bf16 %v412, %v411
        %v421 = vld [vmem:[%s390] sm:$0xff]
        %v422 = vld [vmem:[%s390 + $0x8] sm:$0xff]
        %v423 = vld [vmem:[%s390 + $0x10] sm:$0xff]
        %v424 = vld [vmem:[%s390 + $0x18] sm:$0xff]
        %v425 = vld [vmem:[%s390 + $0x20] sm:$0xff]
        %v426 = vld [vmem:[%s390 + $0x28] sm:$0xff]
        %v427 = vld [vmem:[%s390 + $0x30] sm:$0xff]
        %v428 = vld [vmem:[%s390 + $0x38] sm:$0xff]
        %v429 = vld [vmem:[%s390 + $0x40] sm:$0xff]
        %v430 = vld [vmem:[%s390 + $0x48] sm:$0xff]
        %v431 = vld [vmem:[%s390 + $0x50] sm:$0xff]
        %v432 = vld [vmem:[%s390 + $0x58] sm:$0xff]
        %v433 = vld [vmem:[%s390 + $0x60] sm:$0xff]
        %v434 = vld [vmem:[%s390 + $0x68] sm:$0xff]
        %v435 = vld [vmem:[%s390 + $0x70] sm:$0xff]
        %v436 = vld [vmem:[%s390 + $0x78] sm:$0xff]
        %v437 = vpack.c.bf16 %v422, %v421
        %v438 = vpack.c.bf16 %v424, %v423
        %v439 = vpack.c.bf16 %v426, %v425
        %v440 = vpack.c.bf16 %v428, %v427
        %v441 = vpack.c.bf16 %v430, %v429
        %v442 = vpack.c.bf16 %v432, %v431
        %v443 = vpack.c.bf16 %v434, %v433
        %v444 = vpack.c.bf16 %v436, %v435
        %v445 = vld [vmem:[%s2] sm:$0xf]
        %v446 = vld [vmem:[%s2 + $0x4] sm:$0x3]
        %v447 = vld [vmem:[%s3] sm:$0x3]
        %vm448 = vcmask 31744
        %v450 = vsel %vm448, %v437, 0
        %v453 = vsel %vm448, %v438, 0
        %v456 = vsel %vm448, %v439, 0
        %v459 = vsel %vm448, %v440, 0
        %v462 = vsel %vm448, %v441, 0
        %v465 = vsel %vm448, %v442, 0
        %v468 = vsel %vm448, %v443, 0
        %v471 = vsel %vm448, %v444, 0
        %vm473 = vcmask 1041408
        %v475 = vsel %vm473, %v447, 0
        %477 = vmatpush.bf16.msra.mxu0 0
        %478 = vmatpush.bf16.msra.mxu0 0
        %479 = vmatpush.bf16.msra.mxu0 0
        %480 = vmatpush.bf16.msra.mxu0 0
        %481 = vmatpush.bf16.msra.mxu0 0
        %482 = vmatpush.bf16.msra.mxu0 0
        %483 = vmatpush.bf16.msra.mxu0 0
        %484 = vmatpush.bf16.msra.mxu0 %v475
        %485 = vmatmul.bf16.gmra.mxu0 %v450
        %v486 = vpop.f32.mrf.mxu0
        %v487 = vadd.f32 0.0, %v486
        %v488 = vpop.f32.mrf.mxu0
        %v489 = vadd.f32 0.0, %v488
        %490 = vmatmul.bf16.gmra.mxu0 %v453
        %v491 = vpop.f32.mrf.mxu0
        %v492 = vadd.f32 0.0, %v491
        %v493 = vpop.f32.mrf.mxu0
        %v494 = vadd.f32 0.0, %v493
        %495 = vmatmul.bf16.gmra.mxu0 %v456
        %v496 = vpop.f32.mrf.mxu0
        %v497 = vadd.f32 0.0, %v496
        %v498 = vpop.f32.mrf.mxu0
        %v499 = vadd.f32 0.0, %v498
        %500 = vmatmul.bf16.gmra.mxu0 %v459
        %v501 = vpop.f32.mrf.mxu0
        %v502 = vadd.f32 0.0, %v501
        %v503 = vpop.f32.mrf.mxu0
        %v504 = vadd.f32 0.0, %v503
        %505 = vmatmul.bf16.gmra.mxu0 %v462
        %v506 = vpop.f32.mrf.mxu0
        %v507 = vadd.f32 0.0, %v506
        %v508 = vpop.f32.mrf.mxu0
        %v509 = vadd.f32 0.0, %v508
        %510 = vmatmul.bf16.gmra.mxu0 %v465
        %v511 = vpop.f32.mrf.mxu0
        %v512 = vadd.f32 0.0, %v511
        %v513 = vpop.f32.mrf.mxu0
        %v514 = vadd.f32 0.0, %v513
        %515 = vmatmul.bf16.gmra.mxu0 %v468
        %v516 = vpop.f32.mrf.mxu0
        %v517 = vadd.f32 0.0, %v516
        %v518 = vpop.f32.mrf.mxu0
        %v519 = vadd.f32 0.0, %v518
        %520 = vmatmul.bf16.gmra.mxu0 %v471
        %v521 = vpop.f32.mrf.mxu0
        %v522 = vadd.f32 0.0, %v521
        %v523 = vpop.f32.mrf.mxu0
        %v524 = vadd.f32 0.0, %v523
        %525 = vdwg.mxu0
        %v528 = vunpack.c.l.b16 %v445
        %v529 = vunpack.c.l.b16 %v446
        %v530 = vpack.c.b16 %v529, %v528
        %vm531 = vcmask 97280
        %v533 = vsel %vm531, %v413, 0
        %v536 = vsel %vm531, %v414, 0
        %v539 = vsel %vm531, %v415, 0
        %v542 = vsel %vm531, %v416, 0
        %v545 = vsel %vm531, %v417, 0
        %v548 = vsel %vm531, %v418, 0
        %v551 = vsel %vm531, %v419, 0
        %v554 = vsel %vm531, %v420, 0
        %vm556 = vcmask 1045504
        %v558 = vsel %vm556, %v530, 0
        %560 = vmatpush.bf16.msra.mxu0 0
        %561 = vmatpush.bf16.msra.mxu0 0
        %562 = vmatpush.bf16.msra.mxu0 0
        %563 = vmatpush.bf16.msra.mxu0 0
        %564 = vmatpush.bf16.msra.mxu0 0
        %565 = vmatpush.bf16.msra.mxu0 0
        %566 = vmatpush.bf16.msra.mxu0 0
        %567 = vmatpush.bf16.msra.mxu0 %v558
        %568 = vmatmul.bf16.gmra.mxu0 %v533
        %v569 = vpop.f32.mrf.mxu0
        %v570 = vadd.f32 %v487, %v569
        %v571 = vpop.f32.mrf.mxu0
        %v572 = vadd.f32 %v489, %v571
        %573 = vmatmul.bf16.gmra.mxu0 %v536
        %v574 = vpop.f32.mrf.mxu0
        %v575 = vadd.f32 %v492, %v574
        %v576 = vpop.f32.mrf.mxu0
        %v577 = vadd.f32 %v494, %v576
        %578 = vmatmul.bf16.gmra.mxu0 %v539
        %v579 = vpop.f32.mrf.mxu0
        %v580 = vadd.f32 %v497, %v579
        %v581 = vpop.f32.mrf.mxu0
        %v582 = vadd.f32 %v499, %v581
        %583 = vmatmul.bf16.gmra.mxu0 %v542
        %v584 = vpop.f32.mrf.mxu0
        %v585 = vadd.f32 %v502, %v584
        %v586 = vpop.f32.mrf.mxu0
        %v587 = vadd.f32 %v504, %v586
        %588 = vmatmul.bf16.gmra.mxu0 %v545
        %v589 = vpop.f32.mrf.mxu0
        %v590 = vadd.f32 %v507, %v589
        %v591 = vpop.f32.mrf.mxu0
        %v592 = vadd.f32 %v509, %v591
        %593 = vmatmul.bf16.gmra.mxu0 %v548
        %v594 = vpop.f32.mrf.mxu0
        %v595 = vadd.f32 %v512, %v594
        %v596 = vpop.f32.mrf.mxu0
        %v597 = vadd.f32 %v514, %v596
        %598 = vmatmul.bf16.gmra.mxu0 %v551
        %v599 = vpop.f32.mrf.mxu0
        %v600 = vadd.f32 %v517, %v599
        %v601 = vpop.f32.mrf.mxu0
        %v602 = vadd.f32 %v519, %v601
        %603 = vmatmul.bf16.gmra.mxu0 %v554
        %v604 = vpop.f32.mrf.mxu0
        %v605 = vadd.f32 %v522, %v604
        %v606 = vpop.f32.mrf.mxu0
        %v607 = vadd.f32 %v524, %v606
        %608 = vdwg.mxu0
        %v609 = vld [vmem:[%s4] sm:$0x1]
        %v611 = vperm.slane %v609, 0
        %v613 = vadd.f32 %v570, %v611
        %v614 = vadd.f32 %v572, %v611
        %v615 = vadd.f32 %v575, %v611
        %v616 = vadd.f32 %v577, %v611
        %v617 = vadd.f32 %v580, %v611
        %v618 = vadd.f32 %v582, %v611
        %v619 = vadd.f32 %v585, %v611
        %v620 = vadd.f32 %v587, %v611
        %v621 = vadd.f32 %v590, %v611
        %v622 = vadd.f32 %v592, %v611
        %v623 = vadd.f32 %v595, %v611
        %v624 = vadd.f32 %v597, %v611
        %v625 = vadd.f32 %v600, %v611
        %v626 = vadd.f32 %v602, %v611
        %v627 = vadd.f32 %v605, %v611
        %v628 = vadd.f32 %v607, %v611
        %v629 = vmax.f32 %v613, 0.0
        %v630 = vmax.f32 %v614, 0.0
        %v631 = vmax.f32 %v615, 0.0
        %v632 = vmax.f32 %v616, 0.0
        %v633 = vmax.f32 %v617, 0.0
        %v634 = vmax.f32 %v618, 0.0
        %v635 = vmax.f32 %v619, 0.0
        %v636 = vmax.f32 %v620, 0.0
        %v637 = vmax.f32 %v621, 0.0
        %v638 = vmax.f32 %v622, 0.0
        %v639 = vmax.f32 %v623, 0.0
        %v640 = vmax.f32 %v624, 0.0
        %v641 = vmax.f32 %v625, 0.0
        %v642 = vmax.f32 %v626, 0.0
        %v643 = vmax.f32 %v627, 0.0
        %v644 = vmax.f32 %v628, 0.0
        %v645 = vpack.c.bf16 %v630, %v629
        %v646 = vpack.c.bf16 %v632, %v631
        %v647 = vpack.c.bf16 %v634, %v633
        %v648 = vpack.c.bf16 %v636, %v635
        %v649 = vpack.c.bf16 %v638, %v637
        %v650 = vpack.c.bf16 %v640, %v639
        %v651 = vpack.c.bf16 %v642, %v641
        %v652 = vpack.c.bf16 %v644, %v643
        %v653 = vld [vmem:[%s5] sm:$0xf]
        %v654 = vld [vmem:[%s5 + $0x4] sm:$0xf]
        %v655 = vld [vmem:[%s5 + $0x8] sm:$0xf]
        %v656 = vld [vmem:[%s5 + $0xc] sm:$0xf]
        %v657 = vld [vmem:[%s6] sm:$0x1]
        %v659 = vperm.slane %v657, 0
        %v665 = vunpack.c.l.b16 %v653
        %v666 = vunpack.c.l.b16 %v654
        %v667 = vunpack.c.l.b16 %v655
        %v668 = vunpack.c.l.b16 %v656
        %v669 = vpack.c.b16 %v666, %v665
        %v670 = vpack.c.b16 %v668, %v667
        %vm673 = vcmask 261120
        %v675 = vsel %vm673, %v645, 0
        %v678 = vsel %vm673, %v646, 0
        %v681 = vsel %vm673, %v647, 0
        %v684 = vsel %vm673, %v648, 0
        %v687 = vsel %vm673, %v649, 0
        %v690 = vsel %vm673, %v650, 0
        %v693 = vsel %vm673, %v651, 0
        %v696 = vsel %vm673, %v652, 0
        %698 = vmatpush.bf16.msra.mxu0 0
        %699 = vmatpush.bf16.msra.mxu0 0
        %700 = vmatpush.bf16.msra.mxu0 0
        %701 = vmatpush.bf16.msra.mxu0 0
        %702 = vmatpush.bf16.msra.mxu0 0
        %703 = vmatpush.bf16.msra.mxu0 0
        %704 = vmatpush.bf16.msra.mxu0 %v670
        %705 = vmatpush.bf16.msra.mxu0 %v669
        %706 = vmatmul.bf16.gmra.mxu0 %v675
        %v707 = vpop.f32.mrf.mxu0
        %v708 = vadd.f32 %v659, %v707
        %v709 = vpop.f32.mrf.mxu0
        %v710 = vadd.f32 %v659, %v709
        %711 = vmatmul.bf16.gmra.mxu0 %v678
        %v712 = vpop.f32.mrf.mxu0
        %v713 = vadd.f32 %v659, %v712
        %v714 = vpop.f32.mrf.mxu0
        %v715 = vadd.f32 %v659, %v714
        %716 = vmatmul.bf16.gmra.mxu0 %v681
        %v717 = vpop.f32.mrf.mxu0
        %v718 = vadd.f32 %v659, %v717
        %v719 = vpop.f32.mrf.mxu0
        %v720 = vadd.f32 %v659, %v719
        %721 = vmatmul.bf16.gmra.mxu0 %v684
        %v722 = vpop.f32.mrf.mxu0
        %v723 = vadd.f32 %v659, %v722
        %v724 = vpop.f32.mrf.mxu0
        %v725 = vadd.f32 %v659, %v724
        %726 = vmatmul.bf16.gmra.mxu0 %v687
        %v727 = vpop.f32.mrf.mxu0
        %v728 = vadd.f32 %v659, %v727
        %v729 = vpop.f32.mrf.mxu0
        %v730 = vadd.f32 %v659, %v729
        %731 = vmatmul.bf16.gmra.mxu0 %v690
        %v732 = vpop.f32.mrf.mxu0
        %v733 = vadd.f32 %v659, %v732
        %v734 = vpop.f32.mrf.mxu0
        %v735 = vadd.f32 %v659, %v734
        %736 = vmatmul.bf16.gmra.mxu0 %v693
        %v737 = vpop.f32.mrf.mxu0
        %v738 = vadd.f32 %v659, %v737
        %v739 = vpop.f32.mrf.mxu0
        %v740 = vadd.f32 %v659, %v739
        %741 = vmatmul.bf16.gmra.mxu0 %v696
        %v742 = vpop.f32.mrf.mxu0
        %v743 = vadd.f32 %v659, %v742
        %v744 = vpop.f32.mrf.mxu0
        %v745 = vadd.f32 %v659, %v744
        %746 = vdwg.mxu0
        %v747 = vmax.f32 %v708, 0.0
        %v748 = vmax.f32 %v710, 0.0
        %v749 = vmax.f32 %v713, 0.0
        %v750 = vmax.f32 %v715, 0.0
        %v751 = vmax.f32 %v718, 0.0
        %v752 = vmax.f32 %v720, 0.0
        %v753 = vmax.f32 %v723, 0.0
        %v754 = vmax.f32 %v725, 0.0
        %v755 = vmax.f32 %v728, 0.0
        %v756 = vmax.f32 %v730, 0.0
        %v757 = vmax.f32 %v733, 0.0
        %v758 = vmax.f32 %v735, 0.0
        %v759 = vmax.f32 %v738, 0.0
        %v760 = vmax.f32 %v740, 0.0
        %v761 = vmax.f32 %v743, 0.0
        %v762 = vmax.f32 %v745, 0.0
        %v763 = vld [vmem:[%s7] sm:$0x1]
        %v765 = vperm.slane %v763, 0
        %v767 = vmul.f32 %v747, %v765
        %v768 = vmul.f32 %v748, %v765
        %v769 = vmul.f32 %v749, %v765
        %v770 = vmul.f32 %v750, %v765
        %v771 = vmul.f32 %v751, %v765
        %v772 = vmul.f32 %v752, %v765
        %v773 = vmul.f32 %v753, %v765
        %v774 = vmul.f32 %v754, %v765
        %v775 = vmul.f32 %v755, %v765
        %v776 = vmul.f32 %v756, %v765
        %v777 = vmul.f32 %v757, %v765
        %v778 = vmul.f32 %v758, %v765
        %v779 = vmul.f32 %v759, %v765
        %v780 = vmul.f32 %v760, %v765
        %v781 = vmul.f32 %v761, %v765
        %v782 = vmul.f32 %v762, %v765
        %v783 = vsel %vm673, %v767, 0.0
        %784 = vadd.xlane.f32.xlu0 %v783
        %v785 = vpop.xlane.xlu0 %784
        %v786 = vsel %vm673, %v768, 0.0
        %787 = vadd.xlane.f32.xlu0 %v786
        %v788 = vpop.xlane.xlu0 %787
        %v789 = vsel %vm673, %v769, 0.0
        %790 = vadd.xlane.f32.xlu0 %v789
        %v791 = vpop.xlane.xlu0 %790
        %v792 = vsel %vm673, %v770, 0.0
        %793 = vadd.xlane.f32.xlu0 %v792
        %v794 = vpop.xlane.xlu0 %793
        %v795 = vsel %vm673, %v771, 0.0
        %796 = vadd.xlane.f32.xlu0 %v795
        %v797 = vpop.xlane.xlu0 %796
        %v798 = vsel %vm673, %v772, 0.0
        %799 = vadd.xlane.f32.xlu0 %v798
        %v800 = vpop.xlane.xlu0 %799
        %v801 = vsel %vm673, %v773, 0.0
        %802 = vadd.xlane.f32.xlu0 %v801
        %v803 = vpop.xlane.xlu0 %802
        %v804 = vsel %vm673, %v774, 0.0
        %805 = vadd.xlane.f32.xlu0 %v804
        %v806 = vpop.xlane.xlu0 %805
        %v807 = vsel %vm673, %v775, 0.0
        %808 = vadd.xlane.f32.xlu0 %v807
        %v809 = vpop.xlane.xlu0 %808
        %v810 = vsel %vm673, %v776, 0.0
        %811 = vadd.xlane.f32.xlu0 %v810
        %v812 = vpop.xlane.xlu0 %811
        %v813 = vsel %vm673, %v777, 0.0
        %814 = vadd.xlane.f32.xlu0 %v813
        %v815 = vpop.xlane.xlu0 %814
        %v816 = vsel %vm673, %v778, 0.0
        %817 = vadd.xlane.f32.xlu0 %v816
        %v818 = vpop.xlane.xlu0 %817
        %v819 = vsel %vm673, %v779, 0.0
        %820 = vadd.xlane.f32.xlu0 %v819
        %v821 = vpop.xlane.xlu0 %820
        %v822 = vsel %vm673, %v780, 0.0
        %823 = vadd.xlane.f32.xlu0 %v822
        %v824 = vpop.xlane.xlu0 %823
        %v825 = vsel %vm673, %v781, 0.0
        %826 = vadd.xlane.f32.xlu0 %v825
        %v827 = vpop.xlane.xlu0 %826
        %v828 = vsel %vm673, %v782, 0.0
        %829 = vadd.xlane.f32.xlu0 %v828
        %v830 = vpop.xlane.xlu0 %829
        %v831 = vld [vmem:[#allocation2] sm:$0x1]
        %833 = vset.pattern.permute.xlu0 0
        %834 = vperm.xlu0 %833, %v831
        %v835 = vpop.permute.xlu0 %834
        %v837 = vperm.slane %v835, 0
        %v838 = vadd.f32 %v785, %v837
        %v839 = vadd.f32 %v788, %v837
        %v840 = vadd.f32 %v791, %v837
        %v841 = vadd.f32 %v794, %v837
        %v842 = vadd.f32 %v797, %v837
        %v843 = vadd.f32 %v800, %v837
        %v844 = vadd.f32 %v803, %v837
        %v845 = vadd.f32 %v806, %v837
        %v846 = vadd.f32 %v809, %v837
        %v847 = vadd.f32 %v812, %v837
        %v848 = vadd.f32 %v815, %v837
        %v849 = vadd.f32 %v818, %v837
        %v850 = vadd.f32 %v821, %v837
        %v851 = vadd.f32 %v824, %v837
        %v852 = vadd.f32 %v827, %v837
        %v853 = vadd.f32 %v830, %v837
        %v870 = vlaneseq
        %v871 = vand.u32 %v870, 127
        %v872 = vperm.slane %v838, %v871
        %v873 = vadd.s32 %v871, 4294967288
        %v874 = vperm.slane %v839, %v873
        %vm875 = vcmask 130112
        %v876 = vsel %vm875, %v874, %v872
        %v877 = vadd.s32 %v871, 4294967280
        %v878 = vperm.slane %v840, %v877
        %vm879 = vcmask 195712
        %v880 = vsel %vm879, %v878, %v876
        %v881 = vadd.s32 %v871, 4294967272
        %v882 = vperm.slane %v841, %v881
        %vm883 = vcmask 261312
        %v884 = vsel %vm883, %v882, %v880
        %v885 = vadd.s32 %v871, 4294967264
        %v886 = vperm.slane %v842, %v885
        %vm887 = vcmask 326912
        %v888 = vsel %vm887, %v886, %v884
        %v889 = vadd.s32 %v871, 4294967256
        %v890 = vperm.slane %v843, %v889
        %vm891 = vcmask 392512
        %v892 = vsel %vm891, %v890, %v888
        %v893 = vadd.s32 %v871, 4294967248
        %v894 = vperm.slane %v844, %v893
        %vm895 = vcmask 458112
        %v896 = vsel %vm895, %v894, %v892
        %v897 = vadd.s32 %v871, 4294967240
        %v898 = vperm.slane %v845, %v897
        %vm899 = vcmask 523712
        %v900 = vsel %vm899, %v898, %v896
        %v901 = vadd.s32 %v871, 4294967232
        %v902 = vperm.slane %v846, %v901
        %vm903 = vcmask 589312
        %v904 = vsel %vm903, %v902, %v900
        %v905 = vadd.s32 %v871, 4294967224
        %v906 = vperm.slane %v847, %v905
        %vm907 = vcmask 654912
        %v908 = vsel %vm907, %v906, %v904
        %v909 = vadd.s32 %v871, 4294967216
        %v910 = vperm.slane %v848, %v909
        %vm911 = vcmask 720512
        %v912 = vsel %vm911, %v910, %v908
        %v913 = vadd.s32 %v871, 4294967208
        %v914 = vperm.slane %v849, %v913
        %vm915 = vcmask 786112
        %v916 = vsel %vm915, %v914, %v912
        %v917 = vadd.s32 %v871, 4294967200
        %v918 = vperm.slane %v850, %v917
        %vm919 = vcmask 851712
        %v920 = vsel %vm919, %v918, %v916
        %v921 = vadd.s32 %v871, 4294967192
        %v922 = vperm.slane %v851, %v921
        %vm923 = vcmask 917312
        %v924 = vsel %vm923, %v922, %v920
        %v925 = vadd.s32 %v871, 4294967184
        %v926 = vperm.slane %v852, %v925
        %vm927 = vcmask 982912
        %v928 = vsel %vm927, %v926, %v924
        %v929 = vadd.s32 %v871, 4294967176
        %v930 = vperm.slane %v853, %v929
        %vm931 = vcmask 1048512
        %v932 = vsel %vm931, %v930, %v928
        %934 = vst [vmem:[%s367] sm:$0x1] %v932
        %s935 = sand.u32 %s232, 1
        %s936 = scalar_lea.sflag [#allocation4], %s935
        %s937 = sand.u32 %s232, 1
        %s938 = scalar_lea.vmem [#allocation3], %s937
        // Predicated region
        $region57: #{tpu_custom_call.1} parent=55 // pred_check
          %p939 = pneg %p242
        $region58: #{tpu_custom_call.1} parent=55 // pred_check_branch
          %941 = sbr.rel (%p939) target = $region60
        $region59: #{tpu_custom_call.1} parent=55 // pred_region
          %943 = vsyncadd %s936, 0
          %s944 = scalar_lea.hbm %s9, %s25
          %s946 = sshll.u32 %s938, 4
          %s947 = int_to_ptr.vmem [resolvable:$true] %s946
          %s948 = sshll.u32 %s944, 4
          %s949 = int_to_ptr.hbm [resolvable:$true] %s948
          %951 = dma.vmem_to_hbm [thread:$0]  %s947, 16, %s949, %s936
        $region60: #{tpu_custom_call.1} parent=55 // pred_fallthru
          _
      $region56: #{tpu_custom_call.1} parent=5 // pred_fallthru
        _
      %p952 = scmp.le.s32.totalorder 2, %s20
      // Predicated region
      $region61: #{tpu_custom_call.1} parent=5 // pred_check
        %p953 = pneg %p952
      $region62: #{tpu_custom_call.1} parent=5 // pred_check_branch
        %955 = sbr.rel (%p953) target = $region64
      $region63: #{tpu_custom_call.1} parent=5 // pred_region
        %s956 = ssub.s32 %s20, 2
        // Predicated region
        $region65: #{tpu_custom_call.1} parent=63 // pred_check
          %p957 = pneg %p248
        $region66: #{tpu_custom_call.1} parent=63 // pred_check_branch
          %959 = sbr.rel (%p957) target = $region68
        $region67: #{tpu_custom_call.1} parent=63 // pred_region
          %s960 = sand.u32 %s233, 1
          %s961 = scalar_lea.sflag [#allocation4], %s960
          %s962 = sand.u32 %s233, 1
          %s963 = scalar_lea.vmem [#allocation3], %s962
          %965 = dma.done %s961, 16
        $region68: #{tpu_custom_call.1} parent=63 // pred_fallthru
          _
      $region64: #{tpu_custom_call.1} parent=5 // pred_fallthru
        _
    $region6: #{tpu_custom_call.1} parent=1 // loop_footer
      %s24 = sadd.s32 1, %s20
    $region7: #{tpu_custom_call.1} parent=1 // loop_footer_branch
      %19 = sbr.rel target = $region3
    $region8: #{tpu_custom_call.1} parent=1 // loop_exit
      _
    %966 = vsyncpa [#allocation4], 1
    %s967 = scalar_lea.sflag [#allocation4], 1
    %968 = vsyncpa %s967, 1

</llo_original>
